<compile_context>
chip_gen: v7x
topology: tpu7x:2x2x1
jax: 0.10.0
libtpu: 0.0.40
codegen_flags: <defaults>
</compile_context>

<pallas_src>
import functools

import jax
import jax.numpy as jnp
from jax.experimental import pallas as pl
from jax.experimental.pallas import tpu as pltpu


def _round_up(n, m):
    return ((n + m - 1) // m) * m


def _pick_tile(npad, cap=512):
    """Largest multiple of 128 that divides npad and is <= cap (npad % 128 == 0)."""
    t = min(cap, npad)
    while npad % t:
        t -= 128
    return t


def precompute_kernel(x_ref, wT_ref, b_ref, t_ref, e_ref, scale_ref, v_ref, *,
                      inv_sigma, weight):
    # Linear layer as VPU broadcast-multiply + XLU lane reduction (avoids a
    # degenerate (D,1) MXU matvec).  Only O(N) transcendentals live here.
    lin = jnp.sum(x_ref[...] * wT_ref[...], axis=1, keepdims=True) + b_ref[...]
    lam = jnp.exp(lin)                               # hazard rate, (TM, 1)
    R = 1.0 - jnp.exp(-lam * t_ref[...])             # failure CDF (== Rii)
    u = jnp.exp(-inv_sigma * R)                      # row factor
    scale_ref[...] = (weight * e_ref[...]) * u       # weight * e_i * u_i
    v_ref[...] = jnp.exp(inv_sigma * R)              # column (summation) factor


def pairwise_kernel(t_row_ref, scale_ref, t_col_ref, v_col_ref, out_ref, acc_ref):
    # t_row/scale: (1, TM) lane-major (output index i)
    # t_col/v_col: (TN, 1) sublane-major (summation index j)
    j = pl.program_id(1)

    @pl.when(j == 0)
    def _():
        acc_ref[...] = jnp.zeros_like(acc_ref)

    # (TN,1) vs (1,TM) broadcast: single compare + select replaces
    # sign/relu/mul and the N^2 exp of the reference formulation.
    contrib = jnp.where(t_col_ref[...] > t_row_ref[...], v_col_ref[...], 0.0)
    acc_ref[...] += jnp.sum(contrib, axis=0, keepdims=True)     # (1, TM)

    @pl.when(j == pl.num_programs(1) - 1)
    def _():
        out_ref[...] = acc_ref[...] * scale_ref[...]            # lane-dense store


def ranking_wrapper(x, w, b, t, e, *, sigma=1.0, weight=1.0):
    """x: (N, D), w: (D, 1), b: (1,), t: (N, 1), e: (N, 1) -> (N, 1)."""
    N, D = x.shape
    f32 = jnp.float32
    x = x.astype(f32)
    t = t.reshape(N, 1).astype(f32)
    e = e.reshape(N, 1).astype(f32)
    wT = w.reshape(1, D).astype(f32)
    b2 = b.reshape(1, 1).astype(f32)

    Npad = _round_up(N, 128)
    TILE = _pick_tile(Npad, 512)
    pad = Npad - N

    x_p = jnp.pad(x, ((0, pad), (0, 0)))
    t_p = jnp.pad(t, ((0, pad), (0, 0)))
    e_p = jnp.pad(e, ((0, pad), (0, 0)))

    # ---- Stage 1: per-sample hazard / CDF / factored exponentials (O(N*D)). ----
    pre = functools.partial(
        precompute_kernel, inv_sigma=1.0 / float(sigma), weight=float(weight)
    )
    scale_p, v_p = pl.pallas_call(
        pre,
        out_shape=(jax.ShapeDtypeStruct((Npad, 1), f32),
                   jax.ShapeDtypeStruct((Npad, 1), f32)),
        grid=(Npad // TILE,),
        in_specs=[
            pl.BlockSpec((TILE, D), lambda i: (i, 0)),   # x row tile
            pl.BlockSpec((1, D), lambda i: (0, 0)),      # W^T
            pl.BlockSpec((1, 1), lambda i: (0, 0)),      # b
            pl.BlockSpec((TILE, 1), lambda i: (i, 0)),   # t
            pl.BlockSpec((TILE, 1), lambda i: (i, 0)),   # e
        ],
        out_specs=(pl.BlockSpec((TILE, 1), lambda i: (i, 0)),
                   pl.BlockSpec((TILE, 1), lambda i: (i, 0))),
        compiler_params=pltpu.CompilerParams(dimension_semantics=("parallel",)),
    )(x_p, wT, b2, t_p, e_p)

    # Padded summation entries get v = 0 -> they contribute nothing.
    col_valid = (jnp.arange(Npad) < N).reshape(Npad, 1)
    v_cols = jnp.where(col_valid, v_p, 0.0)       # (Npad, 1) sublane-major
    t_cols = t_p                                   # (Npad, 1) sublane-major
    # Lane-major row operands (output index i): one cheap wrapper-side reshape.
    t_rows = t_p.reshape(1, Npad)
    scale_rows = scale_p.reshape(1, Npad)

    # ---- Stage 2: tiled O(N^2) pairwise mask + reduce with lane-dense output. ----
    out_row = pl.pallas_call(
        pairwise_kernel,
        out_shape=jax.ShapeDtypeStruct((1, Npad), f32),
        grid=(Npad // TILE, Npad // TILE),
        in_specs=[
            pl.BlockSpec((1, TILE), lambda i, j: (0, i)),   # t_i     (lane-major)
            pl.BlockSpec((1, TILE), lambda i, j: (0, i)),   # scale_i (lane-major)
            pl.BlockSpec((TILE, 1), lambda i, j: (j, 0)),   # t_j     (sublane-major)
            pl.BlockSpec((TILE, 1), lambda i, j: (j, 0)),   # v_j     (sublane-major)
        ],
        out_specs=pl.BlockSpec((1, TILE), lambda i, j: (0, i)),
        scratch_shapes=[pltpu.VMEM((1, TILE), f32)],
        compiler_params=pltpu.CompilerParams(
            dimension_semantics=("parallel", "arbitrary")),
    )(t_rows, scale_rows, t_cols, v_cols)

    return out_row.reshape(Npad, 1)[:N]


def ranking_reference(x, w, b, t, e, *, sigma=1.0, weight=1.0):
    # Direct (unfactored) translation of the PyTorch forward.
    lam = jnp.exp(x @ w + b.reshape(1, 1))
    R = 1.0 - jnp.exp(-lam * t)
    Rii = 1.0 - jnp.exp(-lam * t)
    G = Rii - R.T
    T = jnp.maximum(jnp.sign(t.T - t), 0.0)
    A = T * e
    loss = A * jnp.exp(-G / sigma)
    return weight * jnp.sum(loss, axis=1, keepdims=True)


def _make_inputs(N, D, key):
    kx, kw, kt, ke = jax.random.split(key, 4)
    x = jax.random.normal(kx, (N, D), dtype=jnp.float32)
    # Deterministic synthetic model parameters (no checkpoint load).
    w = 0.1 * jax.random.normal(kw, (D, 1), dtype=jnp.float32)
    b = jnp.array([0.05], dtype=jnp.float32)
    # Survival times (positive) and event indicators in {0, 1}.
    t = jax.random.uniform(kt, (N, 1), dtype=jnp.float32, minval=0.1, maxval=2.0)
    e = (jax.random.uniform(ke, (N, 1)) > 0.5).astype(jnp.float32)
    return x, w, b, t, e


if __name__ == "__main__":
    key = jax.random.PRNGKey(0)

    # Small case (single tile) and a larger case exercising padding + the
    # multi-step accumulation grid.
    for N, D in [(8, 32), (600, 32)]:
        x, w, b, t, e = _make_inputs(N, D, jax.random.fold_in(key, N))
        out = ranking_wrapper(x, w, b, t, e, sigma=1.0, weight=1.0)
        out = jax.block_until_ready(out)
        ref = ranking_reference(x, w, b, t, e, sigma=1.0, weight=1.0)
        assert out.shape == (N, 1)
        assert jnp.allclose(out, ref, atol=1e-3, rtol=2e-4), (N, out, ref)

    print("KERNEL_OK")
</pallas_src>

<mosaic_0001>
module attributes {stable_mosaic.version = 11 : i64} {
  func.func @precompute_kernel(%arg0: i32, %arg1: memref<128x32xf32, #tpu.memory_space<vmem>>, %arg2: memref<1x32xf32, #tpu.memory_space<vmem>>, %arg3: memref<1x1xf32, #tpu.memory_space<vmem>>, %arg4: memref<128x1xf32, #tpu.memory_space<vmem>>, %arg5: memref<128x1xf32, #tpu.memory_space<vmem>>, %arg6: memref<128x1xf32, #tpu.memory_space<vmem>>, %arg7: memref<128x1xf32, #tpu.memory_space<vmem>>) attributes {dimension_semantics = [#tpu.dimension_semantics<parallel>], iteration_bounds = array<i64: 1>, scalar_prefetch = 0 : i64, scratch_operands = 0 : i64, tpu.core_type = #tpu.core_type<tc>, window_params = [{transform_indices = @transform_0, window_bounds = array<i64: 128, 32>}, {pipeline_mode = #tpu.pipeline_mode<synchronous>, transform_indices = @transform_1, window_bounds = array<i64: 1, 32>}, {pipeline_mode = #tpu.pipeline_mode<synchronous>, transform_indices = @transform_2, window_bounds = array<i64: 1, 1>}, {transform_indices = @transform_3, window_bounds = array<i64: 128, 1>}, {transform_indices = @transform_4, window_bounds = array<i64: 128, 1>}, {transform_indices = @transform_5, window_bounds = array<i64: 128, 1>}, {transform_indices = @transform_6, window_bounds = array<i64: 128, 1>}]} {
    %c0 = arith.constant 0 : index
    %c0_0 = arith.constant 0 : index
    %0 = vector.load %arg1[%c0, %c0_0] : memref<128x32xf32, #tpu.memory_space<vmem>>, vector<128x32xf32>
    %c0_1 = arith.constant 0 : index
    %c0_2 = arith.constant 0 : index
    %1 = vector.load %arg2[%c0_1, %c0_2] : memref<1x32xf32, #tpu.memory_space<vmem>>, vector<1x32xf32>
    %2 = vector.broadcast %1 : vector<1x32xf32> to vector<128x32xf32>
    %3 = arith.mulf %0, %2 : vector<128x32xf32>
    %cst = arith.constant dense<0.000000e+00> : vector<128xf32>
    %4 = vector.multi_reduction <add>, %3, %cst [1] : vector<128x32xf32> to vector<128xf32>
    %5 = vector.shape_cast %4 : vector<128xf32> to vector<128x1xf32>
    %c0_3 = arith.constant 0 : index
    %c0_4 = arith.constant 0 : index
    %6 = vector.load %arg3[%c0_3, %c0_4] : memref<1x1xf32, #tpu.memory_space<vmem>>, vector<1x1xf32>
    %7 = vector.broadcast %6 : vector<1x1xf32> to vector<128x1xf32>
    %8 = arith.addf %5, %7 : vector<128x1xf32>
    %9 = math.exp %8 : vector<128x1xf32>
    %cst_5 = arith.constant 0.000000e+00 : f32
    %10 = vector.broadcast %cst_5 : f32 to vector<128x1xf32>
    %11 = arith.subf %10, %9 : vector<128x1xf32>
    %c0_6 = arith.constant 0 : index
    %c0_7 = arith.constant 0 : index
    %12 = vector.load %arg4[%c0_6, %c0_7] : memref<128x1xf32, #tpu.memory_space<vmem>>, vector<128x1xf32>
    %13 = arith.mulf %11, %12 : vector<128x1xf32>
    %14 = math.exp %13 : vector<128x1xf32>
    %cst_8 = arith.constant 1.000000e+00 : f32
    %15 = vector.broadcast %cst_8 : f32 to vector<128x1xf32>
    %16 = arith.subf %15, %14 : vector<128x1xf32>
    %cst_9 = arith.constant -1.000000e+00 : f32
    %17 = vector.broadcast %cst_9 : f32 to vector<128x1xf32>
    %18 = arith.mulf %17, %16 : vector<128x1xf32>
    %19 = math.exp %18 : vector<128x1xf32>
    %c0_10 = arith.constant 0 : index
    %c0_11 = arith.constant 0 : index
    %20 = vector.load %arg5[%c0_10, %c0_11] : memref<128x1xf32, #tpu.memory_space<vmem>>, vector<128x1xf32>
    %cst_12 = arith.constant 1.000000e+00 : f32
    %21 = vector.broadcast %cst_12 : f32 to vector<128x1xf32>
    %22 = arith.mulf %21, %20 : vector<128x1xf32>
    %23 = arith.mulf %22, %19 : vector<128x1xf32>
    %c0_13 = arith.constant 0 : index
    %c0_14 = arith.constant 0 : index
    %24 = vector.load %arg6[%c0_13, %c0_14] : memref<128x1xf32, #tpu.memory_space<vmem>>, vector<128x1xf32>
    tpu.vector_store %arg6[%c0_13, %c0_14], %23 {strides = array<i32>} : memref<128x1xf32, #tpu.memory_space<vmem>>, vector<128x1xf32>,
    %cst_15 = arith.constant 1.000000e+00 : f32
    %25 = vector.broadcast %cst_15 : f32 to vector<128x1xf32>
    %26 = arith.mulf %25, %16 : vector<128x1xf32>
    %27 = math.exp %26 : vector<128x1xf32>
    %c0_16 = arith.constant 0 : index
    %c0_17 = arith.constant 0 : index
    %28 = vector.load %arg7[%c0_16, %c0_17] : memref<128x1xf32, #tpu.memory_space<vmem>>, vector<128x1xf32>
    tpu.vector_store %arg7[%c0_16, %c0_17], %27 {strides = array<i32>} : memref<128x1xf32, #tpu.memory_space<vmem>>, vector<128x1xf32>,
    return
  }
  func.func @transform_0(%arg0: i32) -> (i32, i32) {
    %c0_i32 = arith.constant 0 : i32
    %c0_i32_0 = arith.constant 0 : i32
    return %arg0, %c0_i32 : i32, i32
  }
  func.func @transform_1(%arg0: i32) -> (i32, i32) {
    %c0_i32 = arith.constant 0 : i32
    %c0_i32_0 = arith.constant 0 : i32
    %c0_i32_1 = arith.constant 0 : i32
    return %c0_i32, %c0_i32_0 : i32, i32
  }
  func.func @transform_2(%arg0: i32) -> (i32, i32) {
    %c0_i32 = arith.constant 0 : i32
    %c0_i32_0 = arith.constant 0 : i32
    %c0_i32_1 = arith.constant 0 : i32
    return %c0_i32, %c0_i32_0 : i32, i32
  }
  func.func @transform_3(%arg0: i32) -> (i32, i32) {
    %c0_i32 = arith.constant 0 : i32
    %c0_i32_0 = arith.constant 0 : i32
    return %arg0, %c0_i32 : i32, i32
  }
  func.func @transform_4(%arg0: i32) -> (i32, i32) {
    %c0_i32 = arith.constant 0 : i32
    %c0_i32_0 = arith.constant 0 : i32
    return %arg0, %c0_i32 : i32, i32
  }
  func.func @transform_5(%arg0: i32) -> (i32, i32) {
    %c0_i32 = arith.constant 0 : i32
    %c0_i32_0 = arith.constant 0 : i32
    return %arg0, %c0_i32 : i32, i32
  }
  func.func @transform_6(%arg0: i32) -> (i32, i32) {
    %c0_i32 = arith.constant 0 : i32
    %c0_i32_0 = arith.constant 0 : i32
    return %arg0, %c0_i32 : i32, i32
  }
}

</mosaic_0001>

<llo_original>
// kernel: tpu_custom_call.1
$region0: #{tpu_custom_call.1}
  #allocation0 [shape = 'u32[]', space=smem, size = 0x4, offset = 0x4, fixed_abs, tag = 'smem constant byte address 0x4 - core index']
  #allocation1 [shape = 'u32[144,128]{1,0:T(1,128)}', space=vmem, size = 0x12000, scoped, tag = 'internal scratch']
  #allocation2 [shape = 'f32[1,1]{1,0:T(1,128)S(1)}', space=vmem, size = 0x200, scoped, tag = 'scoped memory for tpu_custom_call.1']
  %s0 = inlined_call_operand.vmem [shape: f32[128,32], index: 0, kind: input, shape index: {}]
  %s1 = inlined_call_operand.vmem [shape: f32[1,32], index: 1, kind: input, shape index: {}]
  %s2 = inlined_call_operand.<no memory space> [shape: f32[1,1], index: 2, kind: input, shape index: {}]
  %s3 = inlined_call_operand.vmem [shape: f32[128,1], index: 3, kind: input, shape index: {}]
  %s4 = inlined_call_operand.vmem [shape: f32[128,1], index: 4, kind: input, shape index: {}]
  %s5 = inlined_call_operand.vmem [shape: f32[128,1], index: 5, kind: output, shape index: {0}]
  %s6 = inlined_call_operand.vmem [shape: f32[128,1], index: 6, kind: output, shape index: {1}]
  %7 = xla_tuple %s5, %s6
  %s8 = sld [smem:[#allocation0]]
  $region38: #{tpu_custom_call.1} parent=0
    _
  %s10 = ssub.s32 1, %s8
  %s11 = scalar_select 0, %s10, %s8
  %v12 = vstv %s2
  %13 = vst [vmem:[#allocation2] sm:$0x1] %v12
  // Predicated region
  $region2: #{tpu_custom_call.1} parent=0 // pred_check
    _
  $region3: #{tpu_custom_call.1} parent=0 // pred_check_branch
    %15 = sbr.rel (0) target = $region5
  $region4: #{tpu_custom_call.1} parent=0 // pred_region
    _
  $region5: #{tpu_custom_call.1} parent=0 // pred_fallthru
    _
  // Predicated region
  $region6: #{tpu_custom_call.1} parent=0 // pred_check
    _
  $region7: #{tpu_custom_call.1} parent=0 // pred_check_branch
    %17 = sbr.rel (0) target = $region9
  $region8: #{tpu_custom_call.1} parent=0 // pred_region
    _
  $region9: #{tpu_custom_call.1} parent=0 // pred_fallthru
    _
  // Predicated region
  $region10: #{tpu_custom_call.1} parent=0 // pred_check
    _
  $region11: #{tpu_custom_call.1} parent=0 // pred_check_branch
    %19 = sbr.rel (0) target = $region13
  $region12: #{tpu_custom_call.1} parent=0 // pred_region
    _
  $region13: #{tpu_custom_call.1} parent=0 // pred_fallthru
    _
  // Predicated region
  $region14: #{tpu_custom_call.1} parent=0 // pred_check
    _
  $region15: #{tpu_custom_call.1} parent=0 // pred_check_branch
    %21 = sbr.rel (0) target = $region17
  $region16: #{tpu_custom_call.1} parent=0 // pred_region
    _
  $region17: #{tpu_custom_call.1} parent=0 // pred_fallthru
    _
  // Predicated region
  $region18: #{tpu_custom_call.1} parent=0 // pred_check
    _
  $region19: #{tpu_custom_call.1} parent=0 // pred_check_branch
    %23 = sbr.rel (0) target = $region21
  $region20: #{tpu_custom_call.1} parent=0 // pred_region
    _
  $region21: #{tpu_custom_call.1} parent=0 // pred_fallthru
    _
  %v24 = vld [vmem:[%s0] sm:$0xff]
  %v25 = vld [vmem:[%s0 + $0x8] sm:$0xff]
  %v26 = vld [vmem:[%s0 + $0x10] sm:$0xff]
  %v27 = vld [vmem:[%s0 + $0x18] sm:$0xff]
  %v28 = vld [vmem:[%s0 + $0x20] sm:$0xff]
  %v29 = vld [vmem:[%s0 + $0x28] sm:$0xff]
  %v30 = vld [vmem:[%s0 + $0x30] sm:$0xff]
  %v31 = vld [vmem:[%s0 + $0x38] sm:$0xff]
  %v32 = vld [vmem:[%s0 + $0x40] sm:$0xff]
  %v33 = vld [vmem:[%s0 + $0x48] sm:$0xff]
  %v34 = vld [vmem:[%s0 + $0x50] sm:$0xff]
  %v35 = vld [vmem:[%s0 + $0x58] sm:$0xff]
  %v36 = vld [vmem:[%s0 + $0x60] sm:$0xff]
  %v37 = vld [vmem:[%s0 + $0x68] sm:$0xff]
  %v38 = vld [vmem:[%s0 + $0x70] sm:$0xff]
  %v39 = vld [vmem:[%s0 + $0x78] sm:$0xff]
  %v40 = vld [vmem:[%s1] sm:$0x1]
  %v42 = vlaneseq
  %v43 = vshrl.u32 %v42, 7
  %v44 = vsub.s32 0, %v43
  %v45 = vrot.slane %v40, %v44
  %v47 = vmul.f32 %v24, %v45
  %v48 = vmul.f32 %v25, %v45
  %v49 = vmul.f32 %v26, %v45
  %v50 = vmul.f32 %v27, %v45
  %v51 = vmul.f32 %v28, %v45
  %v52 = vmul.f32 %v29, %v45
  %v53 = vmul.f32 %v30, %v45
  %v54 = vmul.f32 %v31, %v45
  %v55 = vmul.f32 %v32, %v45
  %v56 = vmul.f32 %v33, %v45
  %v57 = vmul.f32 %v34, %v45
  %v58 = vmul.f32 %v35, %v45
  %v59 = vmul.f32 %v36, %v45
  %v60 = vmul.f32 %v37, %v45
  %v61 = vmul.f32 %v38, %v45
  %v62 = vmul.f32 %v39, %v45
  %vm63 = vcmask 261120
  %v64 = vsel %vm63, %v47, 0.0
  %65 = vadd.xlane.f32.xlu0 %v64
  %v66 = vpop.xlane.xlu0 %65
  %v67 = vsel %vm63, %v48, 0.0
  %68 = vadd.xlane.f32.xlu0 %v67
  %v69 = vpop.xlane.xlu0 %68
  %v70 = vsel %vm63, %v49, 0.0
  %71 = vadd.xlane.f32.xlu0 %v70
  %v72 = vpop.xlane.xlu0 %71
  %v73 = vsel %vm63, %v50, 0.0
  %74 = vadd.xlane.f32.xlu0 %v73
  %v75 = vpop.xlane.xlu0 %74
  %v76 = vsel %vm63, %v51, 0.0
  %77 = vadd.xlane.f32.xlu0 %v76
  %v78 = vpop.xlane.xlu0 %77
  %v79 = vsel %vm63, %v52, 0.0
  %80 = vadd.xlane.f32.xlu0 %v79
  %v81 = vpop.xlane.xlu0 %80
  %v82 = vsel %vm63, %v53, 0.0
  %83 = vadd.xlane.f32.xlu0 %v82
  %v84 = vpop.xlane.xlu0 %83
  %v85 = vsel %vm63, %v54, 0.0
  %86 = vadd.xlane.f32.xlu0 %v85
  %v87 = vpop.xlane.xlu0 %86
  %v88 = vsel %vm63, %v55, 0.0
  %89 = vadd.xlane.f32.xlu0 %v88
  %v90 = vpop.xlane.xlu0 %89
  %v91 = vsel %vm63, %v56, 0.0
  %92 = vadd.xlane.f32.xlu0 %v91
  %v93 = vpop.xlane.xlu0 %92
  %v94 = vsel %vm63, %v57, 0.0
  %95 = vadd.xlane.f32.xlu0 %v94
  %v96 = vpop.xlane.xlu0 %95
  %v97 = vsel %vm63, %v58, 0.0
  %98 = vadd.xlane.f32.xlu0 %v97
  %v99 = vpop.xlane.xlu0 %98
  %v100 = vsel %vm63, %v59, 0.0
  %101 = vadd.xlane.f32.xlu0 %v100
  %v102 = vpop.xlane.xlu0 %101
  %v103 = vsel %vm63, %v60, 0.0
  %104 = vadd.xlane.f32.xlu0 %v103
  %v105 = vpop.xlane.xlu0 %104
  %v106 = vsel %vm63, %v61, 0.0
  %107 = vadd.xlane.f32.xlu0 %v106
  %v108 = vpop.xlane.xlu0 %107
  %v109 = vsel %vm63, %v62, 0.0
  %110 = vadd.xlane.f32.xlu0 %v109
  %v111 = vpop.xlane.xlu0 %110
  %v112 = vld [vmem:[#allocation2] sm:$0x1]
  %v114 = vlaneseq
  %v115 = vshrl.u32 %v114, 7
  %v116 = vsub.s32 0, %v115
  %v117 = vrot.slane %v112, %v116
  %v119 = vadd.f32 %v66, %v117
  %v120 = vadd.f32 %v69, %v117
  %v121 = vadd.f32 %v72, %v117
  %v122 = vadd.f32 %v75, %v117
  %v123 = vadd.f32 %v78, %v117
  %v124 = vadd.f32 %v81, %v117
  %v125 = vadd.f32 %v84, %v117
  %v126 = vadd.f32 %v87, %v117
  %v127 = vadd.f32 %v90, %v117
  %v128 = vadd.f32 %v93, %v117
  %v129 = vadd.f32 %v96, %v117
  %v130 = vadd.f32 %v99, %v117
  %v131 = vadd.f32 %v102, %v117
  %v132 = vadd.f32 %v105, %v117
  %v133 = vadd.f32 %v108, %v117
  %v134 = vadd.f32 %v111, %v117
  %v135 = vmul.f32 %v119, 1.442695
  %v136 = vpow.pop %v135
  %v137 = vmul.f32 %v120, 1.442695
  %v138 = vpow.pop %v137
  %v139 = vmul.f32 %v121, 1.442695
  %v140 = vpow.pop %v139
  %v141 = vmul.f32 %v122, 1.442695
  %v142 = vpow.pop %v141
  %v143 = vmul.f32 %v123, 1.442695
  %v144 = vpow.pop %v143
  %v145 = vmul.f32 %v124, 1.442695
  %v146 = vpow.pop %v145
  %v147 = vmul.f32 %v125, 1.442695
  %v148 = vpow.pop %v147
  %v149 = vmul.f32 %v126, 1.442695
  %v150 = vpow.pop %v149
  %v151 = vmul.f32 %v127, 1.442695
  %v152 = vpow.pop %v151
  %v153 = vmul.f32 %v128, 1.442695
  %v154 = vpow.pop %v153
  %v155 = vmul.f32 %v129, 1.442695
  %v156 = vpow.pop %v155
  %v157 = vmul.f32 %v130, 1.442695
  %v158 = vpow.pop %v157
  %v159 = vmul.f32 %v131, 1.442695
  %v160 = vpow.pop %v159
  %v161 = vmul.f32 %v132, 1.442695
  %v162 = vpow.pop %v161
  %v163 = vmul.f32 %v133, 1.442695
  %v164 = vpow.pop %v163
  %v165 = vmul.f32 %v134, 1.442695
  %v166 = vpow.pop %v165
  %v167 = vsub.f32 0.0, %v136
  %v168 = vsub.f32 0.0, %v138
  %v169 = vsub.f32 0.0, %v140
  %v170 = vsub.f32 0.0, %v142
  %v171 = vsub.f32 0.0, %v144
  %v172 = vsub.f32 0.0, %v146
  %v173 = vsub.f32 0.0, %v148
  %v174 = vsub.f32 0.0, %v150
  %v175 = vsub.f32 0.0, %v152
  %v176 = vsub.f32 0.0, %v154
  %v177 = vsub.f32 0.0, %v156
  %v178 = vsub.f32 0.0, %v158
  %v179 = vsub.f32 0.0, %v160
  %v180 = vsub.f32 0.0, %v162
  %v181 = vsub.f32 0.0, %v164
  %v182 = vsub.f32 0.0, %v166
  %v183 = vld [vmem:[%s3] sm:$0xff]
  %v184 = vld [vmem:[%s3 + $0x8] sm:$0xff]
  %v185 = vld [vmem:[%s3 + $0x10] sm:$0xff]
  %v186 = vld [vmem:[%s3 + $0x18] sm:$0xff]
  %v187 = vld [vmem:[%s3 + $0x20] sm:$0xff]
  %v188 = vld [vmem:[%s3 + $0x28] sm:$0xff]
  %v189 = vld [vmem:[%s3 + $0x30] sm:$0xff]
  %v190 = vld [vmem:[%s3 + $0x38] sm:$0xff]
  %v191 = vld [vmem:[%s3 + $0x40] sm:$0xff]
  %v192 = vld [vmem:[%s3 + $0x48] sm:$0xff]
  %v193 = vld [vmem:[%s3 + $0x50] sm:$0xff]
  %v194 = vld [vmem:[%s3 + $0x58] sm:$0xff]
  %v195 = vld [vmem:[%s3 + $0x60] sm:$0xff]
  %v196 = vld [vmem:[%s3 + $0x68] sm:$0xff]
  %v197 = vld [vmem:[%s3 + $0x70] sm:$0xff]
  %v198 = vld [vmem:[%s3 + $0x78] sm:$0xff]
  %v199 = vmul.f32 %v167, %v183
  %v200 = vmul.f32 %v168, %v184
  %v201 = vmul.f32 %v169, %v185
  %v202 = vmul.f32 %v170, %v186
  %v203 = vmul.f32 %v171, %v187
  %v204 = vmul.f32 %v172, %v188
  %v205 = vmul.f32 %v173, %v189
  %v206 = vmul.f32 %v174, %v190
  %v207 = vmul.f32 %v175, %v191
  %v208 = vmul.f32 %v176, %v192
  %v209 = vmul.f32 %v177, %v193
  %v210 = vmul.f32 %v178, %v194
  %v211 = vmul.f32 %v179, %v195
  %v212 = vmul.f32 %v180, %v196
  %v213 = vmul.f32 %v181, %v197
  %v214 = vmul.f32 %v182, %v198
  %v215 = vmul.f32 %v199, 1.442695
  %v216 = vpow.pop %v215
  %v217 = vmul.f32 %v200, 1.442695
  %v218 = vpow.pop %v217
  %v219 = vmul.f32 %v201, 1.442695
  %v220 = vpow.pop %v219
  %v221 = vmul.f32 %v202, 1.442695
  %v222 = vpow.pop %v221
  %v223 = vmul.f32 %v203, 1.442695
  %v224 = vpow.pop %v223
  %v225 = vmul.f32 %v204, 1.442695
  %v226 = vpow.pop %v225
  %v227 = vmul.f32 %v205, 1.442695
  %v228 = vpow.pop %v227
  %v229 = vmul.f32 %v206, 1.442695
  %v230 = vpow.pop %v229
  %v231 = vmul.f32 %v207, 1.442695
  %v232 = vpow.pop %v231
  %v233 = vmul.f32 %v208, 1.442695
  %v234 = vpow.pop %v233
  %v235 = vmul.f32 %v209, 1.442695
  %v236 = vpow.pop %v235
  %v237 = vmul.f32 %v210, 1.442695
  %v238 = vpow.pop %v237
  %v239 = vmul.f32 %v211, 1.442695
  %v240 = vpow.pop %v239
  %v241 = vmul.f32 %v212, 1.442695
  %v242 = vpow.pop %v241
  %v243 = vmul.f32 %v213, 1.442695
  %v244 = vpow.pop %v243
  %v245 = vmul.f32 %v214, 1.442695
  %v246 = vpow.pop %v245
  %v247 = vsub.f32 1.0, %v216
  %v248 = vsub.f32 1.0, %v218
  %v249 = vsub.f32 1.0, %v220
  %v250 = vsub.f32 1.0, %v222
  %v251 = vsub.f32 1.0, %v224
  %v252 = vsub.f32 1.0, %v226
  %v253 = vsub.f32 1.0, %v228
  %v254 = vsub.f32 1.0, %v230
  %v255 = vsub.f32 1.0, %v232
  %v256 = vsub.f32 1.0, %v234
  %v257 = vsub.f32 1.0, %v236
  %v258 = vsub.f32 1.0, %v238
  %v259 = vsub.f32 1.0, %v240
  %v260 = vsub.f32 1.0, %v242
  %v261 = vsub.f32 1.0, %v244
  %v262 = vsub.f32 1.0, %v246
  %v263 = vmul.f32 %v247, -1.0
  %v264 = vmul.f32 %v248, -1.0
  %v265 = vmul.f32 %v249, -1.0
  %v266 = vmul.f32 %v250, -1.0
  %v267 = vmul.f32 %v251, -1.0
  %v268 = vmul.f32 %v252, -1.0
  %v269 = vmul.f32 %v253, -1.0
  %v270 = vmul.f32 %v254, -1.0
  %v271 = vmul.f32 %v255, -1.0
  %v272 = vmul.f32 %v256, -1.0
  %v273 = vmul.f32 %v257, -1.0
  %v274 = vmul.f32 %v258, -1.0
  %v275 = vmul.f32 %v259, -1.0
  %v276 = vmul.f32 %v260, -1.0
  %v277 = vmul.f32 %v261, -1.0
  %v278 = vmul.f32 %v262, -1.0
  %v279 = vmul.f32 %v263, 1.442695
  %v280 = vpow.pop %v279
  %v281 = vmul.f32 %v264, 1.442695
  %v282 = vpow.pop %v281
  %v283 = vmul.f32 %v265, 1.442695
  %v284 = vpow.pop %v283
  %v285 = vmul.f32 %v266, 1.442695
  %v286 = vpow.pop %v285
  %v287 = vmul.f32 %v267, 1.442695
  %v288 = vpow.pop %v287
  %v289 = vmul.f32 %v268, 1.442695
  %v290 = vpow.pop %v289
  %v291 = vmul.f32 %v269, 1.442695
  %v292 = vpow.pop %v291
  %v293 = vmul.f32 %v270, 1.442695
  %v294 = vpow.pop %v293
  %v295 = vmul.f32 %v271, 1.442695
  %v296 = vpow.pop %v295
  %v297 = vmul.f32 %v272, 1.442695
  %v298 = vpow.pop %v297
  %v299 = vmul.f32 %v273, 1.442695
  %v300 = vpow.pop %v299
  %v301 = vmul.f32 %v274, 1.442695
  %v302 = vpow.pop %v301
  %v303 = vmul.f32 %v275, 1.442695
  %v304 = vpow.pop %v303
  %v305 = vmul.f32 %v276, 1.442695
  %v306 = vpow.pop %v305
  %v307 = vmul.f32 %v277, 1.442695
  %v308 = vpow.pop %v307
  %v309 = vmul.f32 %v278, 1.442695
  %v310 = vpow.pop %v309
  %v311 = vld [vmem:[%s4] sm:$0xff]
  %v312 = vld [vmem:[%s4 + $0x8] sm:$0xff]
  %v313 = vld [vmem:[%s4 + $0x10] sm:$0xff]
  %v314 = vld [vmem:[%s4 + $0x18] sm:$0xff]
  %v315 = vld [vmem:[%s4 + $0x20] sm:$0xff]
  %v316 = vld [vmem:[%s4 + $0x28] sm:$0xff]
  %v317 = vld [vmem:[%s4 + $0x30] sm:$0xff]
  %v318 = vld [vmem:[%s4 + $0x38] sm:$0xff]
  %v319 = vld [vmem:[%s4 + $0x40] sm:$0xff]
  %v320 = vld [vmem:[%s4 + $0x48] sm:$0xff]
  %v321 = vld [vmem:[%s4 + $0x50] sm:$0xff]
  %v322 = vld [vmem:[%s4 + $0x58] sm:$0xff]
  %v323 = vld [vmem:[%s4 + $0x60] sm:$0xff]
  %v324 = vld [vmem:[%s4 + $0x68] sm:$0xff]
  %v325 = vld [vmem:[%s4 + $0x70] sm:$0xff]
  %v326 = vld [vmem:[%s4 + $0x78] sm:$0xff]
  %v327 = vmul.f32 %v311, %v280
  %v328 = vmul.f32 %v312, %v282
  %v329 = vmul.f32 %v313, %v284
  %v330 = vmul.f32 %v314, %v286
  %v331 = vmul.f32 %v315, %v288
  %v332 = vmul.f32 %v316, %v290
  %v333 = vmul.f32 %v317, %v292
  %v334 = vmul.f32 %v318, %v294
  %v335 = vmul.f32 %v319, %v296
  %v336 = vmul.f32 %v320, %v298
  %v337 = vmul.f32 %v321, %v300
  %v338 = vmul.f32 %v322, %v302
  %v339 = vmul.f32 %v323, %v304
  %v340 = vmul.f32 %v324, %v306
  %v341 = vmul.f32 %v325, %v308
  %v342 = vmul.f32 %v326, %v310
  %vm343 = vcmask 7168
  %344 = vst.msk [vmem:[%s5] sm:$0xff] %vm343, %v327
  %345 = vst.msk [vmem:[%s5 + $0x8] sm:$0xff] %vm343, %v328
  %346 = vst.msk [vmem:[%s5 + $0x10] sm:$0xff] %vm343, %v329
  %347 = vst.msk [vmem:[%s5 + $0x18] sm:$0xff] %vm343, %v330
  %348 = vst.msk [vmem:[%s5 + $0x20] sm:$0xff] %vm343, %v331
  %349 = vst.msk [vmem:[%s5 + $0x28] sm:$0xff] %vm343, %v332
  %350 = vst.msk [vmem:[%s5 + $0x30] sm:$0xff] %vm343, %v333
  %351 = vst.msk [vmem:[%s5 + $0x38] sm:$0xff] %vm343, %v334
  %352 = vst.msk [vmem:[%s5 + $0x40] sm:$0xff] %vm343, %v335
  %353 = vst.msk [vmem:[%s5 + $0x48] sm:$0xff] %vm343, %v336
  %354 = vst.msk [vmem:[%s5 + $0x50] sm:$0xff] %vm343, %v337
  %355 = vst.msk [vmem:[%s5 + $0x58] sm:$0xff] %vm343, %v338
  %356 = vst.msk [vmem:[%s5 + $0x60] sm:$0xff] %vm343, %v339
  %357 = vst.msk [vmem:[%s5 + $0x68] sm:$0xff] %vm343, %v340
  %358 = vst.msk [vmem:[%s5 + $0x70] sm:$0xff] %vm343, %v341
  %359 = vst.msk [vmem:[%s5 + $0x78] sm:$0xff] %vm343, %v342
  %v360 = vmul.f32 %v247, 1.442695
  %v361 = vpow.pop %v360
  %v362 = vmul.f32 %v248, 1.442695
  %v363 = vpow.pop %v362
  %v364 = vmul.f32 %v249, 1.442695
  %v365 = vpow.pop %v364
  %v366 = vmul.f32 %v250, 1.442695
  %v367 = vpow.pop %v366
  %v368 = vmul.f32 %v251, 1.442695
  %v369 = vpow.pop %v368
  %v370 = vmul.f32 %v252, 1.442695
  %v371 = vpow.pop %v370
  %v372 = vmul.f32 %v253, 1.442695
  %v373 = vpow.pop %v372
  %v374 = vmul.f32 %v254, 1.442695
  %v375 = vpow.pop %v374
  %v376 = vmul.f32 %v255, 1.442695
  %v377 = vpow.pop %v376
  %v378 = vmul.f32 %v256, 1.442695
  %v379 = vpow.pop %v378
  %v380 = vmul.f32 %v257, 1.442695
  %v381 = vpow.pop %v380
  %v382 = vmul.f32 %v258, 1.442695
  %v383 = vpow.pop %v382
  %v384 = vmul.f32 %v259, 1.442695
  %v385 = vpow.pop %v384
  %v386 = vmul.f32 %v260, 1.442695
  %v387 = vpow.pop %v386
  %v388 = vmul.f32 %v261, 1.442695
  %v389 = vpow.pop %v388
  %v390 = vmul.f32 %v262, 1.442695
  %v391 = vpow.pop %v390
  %392 = vst.msk [vmem:[%s6] sm:$0xff] %vm343, %v361
  %393 = vst.msk [vmem:[%s6 + $0x8] sm:$0xff] %vm343, %v363
  %394 = vst.msk [vmem:[%s6 + $0x10] sm:$0xff] %vm343, %v365
  %395 = vst.msk [vmem:[%s6 + $0x18] sm:$0xff] %vm343, %v367
  %396 = vst.msk [vmem:[%s6 + $0x20] sm:$0xff] %vm343, %v369
  %397 = vst.msk [vmem:[%s6 + $0x28] sm:$0xff] %vm343, %v371
  %398 = vst.msk [vmem:[%s6 + $0x30] sm:$0xff] %vm343, %v373
  %399 = vst.msk [vmem:[%s6 + $0x38] sm:$0xff] %vm343, %v375
  %400 = vst.msk [vmem:[%s6 + $0x40] sm:$0xff] %vm343, %v377
  %401 = vst.msk [vmem:[%s6 + $0x48] sm:$0xff] %vm343, %v379
  %402 = vst.msk [vmem:[%s6 + $0x50] sm:$0xff] %vm343, %v381
  %403 = vst.msk [vmem:[%s6 + $0x58] sm:$0xff] %vm343, %v383
  %404 = vst.msk [vmem:[%s6 + $0x60] sm:$0xff] %vm343, %v385
  %405 = vst.msk [vmem:[%s6 + $0x68] sm:$0xff] %vm343, %v387
  %406 = vst.msk [vmem:[%s6 + $0x70] sm:$0xff] %vm343, %v389
  %407 = vst.msk [vmem:[%s6 + $0x78] sm:$0xff] %vm343, %v391
  // Predicated region
  $region22: #{tpu_custom_call.1} parent=0 // pred_check
    _
  $region23: #{tpu_custom_call.1} parent=0 // pred_check_branch
    %409 = sbr.rel (0) target = $region25
  $region24: #{tpu_custom_call.1} parent=0 // pred_region
    _
  $region25: #{tpu_custom_call.1} parent=0 // pred_fallthru
    _
  // Predicated region
  $region26: #{tpu_custom_call.1} parent=0 // pred_check
    _
  $region27: #{tpu_custom_call.1} parent=0 // pred_check_branch
    %411 = sbr.rel (0) target = $region29
  $region28: #{tpu_custom_call.1} parent=0 // pred_region
    _
  $region29: #{tpu_custom_call.1} parent=0 // pred_fallthru
    _
  // Predicated region
  $region30: #{tpu_custom_call.1} parent=0 // pred_check
    _
  $region31: #{tpu_custom_call.1} parent=0 // pred_check_branch
    %413 = sbr.rel (0) target = $region33
  $region32: #{tpu_custom_call.1} parent=0 // pred_region
    _
  $region33: #{tpu_custom_call.1} parent=0 // pred_fallthru
    _
  // Predicated region
  $region34: #{tpu_custom_call.1} parent=0 // pred_check
    _
  $region35: #{tpu_custom_call.1} parent=0 // pred_check_branch
    %415 = sbr.rel (0) target = $region37
  $region36: #{tpu_custom_call.1} parent=0 // pred_region
    _
  $region37: #{tpu_custom_call.1} parent=0 // pred_fallthru
    _

</llo_original>
